<compile_context>
chip_gen: v7x
topology: tpu7x:2x2x1
jax: 0.10.0
libtpu: 0.0.40
codegen_flags: <defaults>
</compile_context>

<pallas_src>
import functools

import jax
import jax.numpy as jnp
from jax.experimental import pallas as pl
from jax.experimental.pallas import tpu as pltpu


# ----------------------------------------------------------------------------
# small helpers
# ----------------------------------------------------------------------------
def _ceil_to(x, m):
    return ((x + m - 1) // m) * m


def _pad_to(x, rows, cols):
    return jnp.pad(x, ((0, rows - x.shape[0]), (0, cols - x.shape[1])))


# ----------------------------------------------------------------------------
# Pallas kernels
# ----------------------------------------------------------------------------
def _gemm_kernel(a_ref, b_ref, bias_ref, *refs, relu, has_res):
    """Tiled GEMM: out = maybe_relu(a @ b + bias [+ residual]).  bf16 in, f32 acc."""
    if has_res:
        res_ref, o_ref, acc_ref = refs
    else:
        o_ref, acc_ref = refs
    k = pl.program_id(2)

    @pl.when(k == 0)
    def _():
        acc_ref[...] = jnp.zeros_like(acc_ref)

    acc_ref[...] += jnp.dot(a_ref[...], b_ref[...],
                            preferred_element_type=jnp.float32)

    @pl.when(k == pl.num_programs(2) - 1)
    def _():
        out = acc_ref[...] + bias_ref[...]
        if has_res:
            out = out + res_ref[...].astype(jnp.float32)   # fused residual add
        if relu:
            out = jnp.maximum(out, 0.0)
        o_ref[...] = out.astype(o_ref.dtype)


def _direct_conv_kernel(x_ref, w_ref, b_ref, o_ref, *, kh, kw, stride, Ho, Wq, relu):
    """Direct KxK conv (no HBM im2col).

    x_ref: (s*s, 1, L, Cin)  phase-decomposed padded activation, spatial flattened
    w_ref: (kh*kw, Cin, TN)  BN-folded weight, tap-major
    b_ref: (1, TN)           BN shift (f32)
    o_ref: (1, Ho*Wq, TN)    output (garbage columns wo>=Wo sliced off by wrapper)
    """
    tn = o_ref.shape[-1]
    acc = jnp.zeros((Ho * Wq, tn), jnp.float32)
    for i in range(kh):
        for j in range(kw):
            ph = (i % stride) * stride + (j % stride)
            start = (i // stride) * Wq + (j // stride)
            win = x_ref[ph, 0, start:start + Ho * Wq, :]   # contiguous 2-D slice
            acc = acc + jnp.dot(win, w_ref[i * kw + j],
                                preferred_element_type=jnp.float32)
    out = acc + b_ref[...]
    if relu:
        out = jnp.maximum(out, 0.0)
    o_ref[0] = out.astype(o_ref.dtype)


def _maxpool_kernel(x_ref, o_ref, *, Ho, Wq):
    """MaxPool 3x3 stride 2: elementwise max over the 9 shifted (flattened) windows."""
    m = None
    for i in range(3):
        for j in range(3):
            ph = (i % 2) * 2 + (j % 2)
            start = (i // 2) * Wq + (j // 2)
            win = x_ref[ph, 0, start:start + Ho * Wq, :]
            m = win if m is None else jnp.maximum(m, win)
    o_ref[0] = m


def _gap_kernel(x_ref, o_ref):
    """Lane-dense global average pool: reduce the spatial axis, keep C on lanes."""
    o_ref[0] = jnp.mean(x_ref[0].astype(jnp.float32), axis=0, keepdims=True)


# ----------------------------------------------------------------------------
# Pallas wrappers
# ----------------------------------------------------------------------------
def gemm_bias_act(a, w, bias, *, residual=None, relu=False, out_dtype=jnp.bfloat16):
    """maybe_relu(a @ w + bias [+ residual]) with bf16 operands / f32 accumulation."""
    M, K = a.shape
    N = w.shape[1]
    TM = min(128, _ceil_to(M, 16))          # adaptive M tile (no blanket pad-to-128)
    TN = min(256, _ceil_to(N, 128))
    TK = min(256, _ceil_to(K, 128))
    Mp, Kp, Np = _ceil_to(M, TM), _ceil_to(K, TK), _ceil_to(N, TN)

    a_p = _pad_to(a.astype(jnp.bfloat16), Mp, Kp)
    w_p = _pad_to(w.astype(jnp.bfloat16), Kp, Np)
    b_p = _pad_to(bias.reshape(1, -1).astype(jnp.float32), 1, Np)

    ins = [a_p, w_p, b_p]
    in_specs = [
        pl.BlockSpec((TM, TK), lambda i, j, k: (i, k)),
        pl.BlockSpec((TK, TN), lambda i, j, k: (k, j)),
        pl.BlockSpec((1, TN), lambda i, j, k: (0, j)),
    ]
    has_res = residual is not None
    if has_res:
        r_p = _pad_to(residual.astype(jnp.bfloat16), Mp, Np)
        ins.append(r_p)
        in_specs.append(pl.BlockSpec((TM, TN), lambda i, j, k: (i, j)))

    out = pl.pallas_call(
        functools.partial(_gemm_kernel, relu=relu, has_res=has_res),
        out_shape=jax.ShapeDtypeStruct((Mp, Np), out_dtype),
        grid_spec=pltpu.PrefetchScalarGridSpec(
            num_scalar_prefetch=0,
            grid=(Mp // TM, Np // TN, Kp // TK),
            in_specs=in_specs,
            out_specs=pl.BlockSpec((TM, TN), lambda i, j, k: (i, j)),
            scratch_shapes=[pltpu.VMEM((TM, TN), jnp.float32)],
        ),
        compiler_params=pltpu.CompilerParams(
            dimension_semantics=("parallel", "parallel", "arbitrary")),
    )(*ins)
    return out[:M, :N]


def conv1x1_bn(x, w_kc, bias, *, stride=1, relu=False, residual=None):
    """1x1 conv + folded BN (+ optional fused residual add + ReLU).  Pure GEMM."""
    if stride > 1:
        x = x[:, ::stride, ::stride, :]
    N, H, W, C = x.shape
    a = x.reshape(N * H * W, C)
    r = None if residual is None else residual.reshape(N * H * W, -1)
    y = gemm_bias_act(a, w_kc, bias, residual=r, relu=relu)
    return y.reshape(N, H, W, w_kc.shape[1])


def conv_spatial_bn(x, w_tap, bias, *, kh, kw, stride, pad, relu):
    """KxK conv + folded BN via the direct-conv kernel (no HBM im2col).

    The padded activation is phase-decomposed (so stride-2 taps become contiguous),
    spatially flattened, and kept VMEM-resident per image; each tap is one MXU dot.
    """
    N, H, W, C = x.shape
    Cout = w_tap.shape[2]
    s = stride
    Ho = (H + 2 * pad - kh) // s + 1
    Wo = (W + 2 * pad - kw) // s + 1
    Hq = Ho + (kh - 1) // s
    Wq = Wo + (kw - 1) // s

    xp = jnp.pad(x, ((0, 0), (pad, s * Hq - H - pad), (pad, s * Wq - W - pad), (0, 0)))
    if s == 1:
        xq = xp[None]                                            # (1, N, Hq, Wq, C)
    else:
        xq = xp.reshape(N, Hq, s, Wq, s, C).transpose(2, 4, 0, 1, 3, 5)
        xq = xq.reshape(s * s, N, Hq, Wq, C)
    extra = Wq - Wo                        # over-read margin for the flattened windows
    xf = xq.reshape(s * s, N, Hq * Wq, C)
    if extra:
        xf = jnp.pad(xf, ((0, 0), (0, 0), (0, extra), (0, 0)))
    L = Hq * Wq + extra

    if Cout % 256 == 0:
        TN = 256
    elif Cout % 128 == 0:
        TN = 128
    else:
        TN = Cout

    out = pl.pallas_call(
        functools.partial(_direct_conv_kernel, kh=kh, kw=kw, stride=s,
                          Ho=Ho, Wq=Wq, relu=relu),
        out_shape=jax.ShapeDtypeStruct((N, Ho * Wq, Cout), jnp.bfloat16),
        grid_spec=pltpu.PrefetchScalarGridSpec(
            num_scalar_prefetch=0,
            grid=(Cout // TN, N),
            in_specs=[
                pl.BlockSpec((s * s, 1, L, C), lambda co, n: (0, n, 0, 0)),
                pl.BlockSpec((kh * kw, C, TN), lambda co, n: (0, 0, co)),
                pl.BlockSpec((1, TN), lambda co, n: (0, co)),
            ],
            out_specs=pl.BlockSpec((1, Ho * Wq, TN), lambda co, n: (n, 0, co)),
        ),
        compiler_params=pltpu.CompilerParams(
            dimension_semantics=("parallel", "parallel")),
    )(xf.astype(jnp.bfloat16), w_tap.astype(jnp.bfloat16),
      bias.reshape(1, Cout).astype(jnp.float32))
    return out.reshape(N, Ho, Wq, Cout)[:, :, :Wo, :]


def maxpool_3x3_s2_p1(x):
    """MaxPool2d(kernel=3, stride=2, padding=1) — padding uses -max_finite (== -inf
    behaviour), so it stays correct even for non-ReLU inputs."""
    N, H, W, C = x.shape
    s, pad = 2, 1
    Ho = (H + 2 * pad - 3) // s + 1
    Wo = (W + 2 * pad - 3) // s + 1
    Hq, Wq = Ho + 1, Wo + 1
    neg = float(jnp.finfo(x.dtype).min)
    xp = jnp.pad(x, ((0, 0), (pad, s * Hq - H - pad), (pad, s * Wq - W - pad), (0, 0)),
                 constant_values=neg)
    xq = xp.reshape(N, Hq, s, Wq, s, C).transpose(2, 4, 0, 1, 3, 5)
    xq = xq.reshape(s * s, N, Hq, Wq, C)
    extra = Wq - Wo
    xf = jnp.pad(xq.reshape(s * s, N, Hq * Wq, C),
                 ((0, 0), (0, 0), (0, extra), (0, 0)), constant_values=neg)
    L = Hq * Wq + extra
    out = pl.pallas_call(
        functools.partial(_maxpool_kernel, Ho=Ho, Wq=Wq),
        out_shape=jax.ShapeDtypeStruct((N, Ho * Wq, C), x.dtype),
        grid_spec=pltpu.PrefetchScalarGridSpec(
            num_scalar_prefetch=0, grid=(N,),
            in_specs=[pl.BlockSpec((s * s, 1, L, C), lambda n: (0, n, 0, 0))],
            out_specs=pl.BlockSpec((1, Ho * Wq, C), lambda n: (n, 0, 0)),
        ),
        compiler_params=pltpu.CompilerParams(dimension_semantics=("parallel",)),
    )(xf)
    return out.reshape(N, Ho, Wq, C)[:, :, :Wo, :]


def global_avgpool(x):
    """AdaptiveAvgPool2d((1,1)) + flatten, lane-dense over C."""
    N, H, W, C = x.shape
    xr = x.reshape(N, H * W, C)
    out = pl.pallas_call(
        _gap_kernel,
        out_shape=jax.ShapeDtypeStruct((N, 1, C), jnp.float32),
        grid_spec=pltpu.PrefetchScalarGridSpec(
            num_scalar_prefetch=0, grid=(N,),
            in_specs=[pl.BlockSpec((1, H * W, C), lambda n: (n, 0, 0))],
            out_specs=pl.BlockSpec((1, 1, C), lambda n: (n, 0, 0)),
        ),
        compiler_params=pltpu.CompilerParams(dimension_semantics=("parallel",)),
    )(xr)
    return out.reshape(N, C)


# ----------------------------------------------------------------------------
# Stem 7x7 conv via im2col (Cin=3 -> blow-up negligible, single K=147 GEMM)
# ----------------------------------------------------------------------------
def _im2col(x, kh, kw, stride, pad):
    N, H, W, C = x.shape
    xp = jnp.pad(x, ((0, 0), (pad, pad), (pad, pad), (0, 0)))
    Ho = (H + 2 * pad - kh) // stride + 1
    Wo = (W + 2 * pad - kw) // stride + 1
    cols = []
    for i in range(kh):
        for j in range(kw):
            cols.append(xp[:, i:i + stride * Ho:stride, j:j + stride * Wo:stride, :])
    cols = jnp.concatenate(cols, axis=-1)
    return cols.reshape(N * Ho * Wo, kh * kw * C), (N, Ho, Wo)


# ----------------------------------------------------------------------------
# ResNet-50 with the CNNModel FC head
# ----------------------------------------------------------------------------
BLOCKS = [(64, 3, 1), (128, 4, 2), (256, 6, 2), (512, 3, 2)]
EXPANSION = 4


def init_params(key, nclasses=1000):
    keys = iter(jax.random.split(key, 128))

    def conv_w(cout, cin, kh, kw):
        std = (2.0 / (cout * kh * kw)) ** 0.5      # kaiming-normal, fan_out
        return std * jax.random.normal(next(keys), (cout, cin, kh, kw), jnp.float32)

    def bn(c):
        # PyTorch default BN init: gamma=1, beta=0, running_mean=0, running_var=1.
        eps = 1e-5
        gamma = jnp.ones((c,), jnp.float32)
        beta = jnp.zeros((c,), jnp.float32)
        mean = jnp.zeros((c,), jnp.float32)
        var = jnp.ones((c,), jnp.float32)
        scale = gamma / jnp.sqrt(var + eps)
        shift = beta - mean * scale
        return scale, shift

    def linear_w(cin, cout):
        bound = 1.0 / (cin ** 0.5)
        return jax.random.uniform(next(keys), (cin, cout), jnp.float32, -bound, bound)

    p = {"conv1_w": conv_w(64, 3, 7, 7)}
    p["bn1_scale"], p["bn1_shift"] = bn(64)

    layers = []
    inplanes = 64
    for width, nblocks, _ in BLOCKS:
        blocks = []
        for bi in range(nblocks):
            bp = {"w1": conv_w(width, inplanes, 1, 1)}
            bp["s1"], bp["b1"] = bn(width)
            bp["w2"] = conv_w(width, width, 3, 3)
            bp["s2"], bp["b2"] = bn(width)
            bp["w3"] = conv_w(width * EXPANSION, width, 1, 1)
            bp["s3"], bp["b3"] = bn(width * EXPANSION)
            if bi == 0:   # downsample branch (channel / stride change)
                bp["wd"] = conv_w(width * EXPANSION, inplanes, 1, 1)
                bp["sd"], bp["bd"] = bn(width * EXPANSION)
            blocks.append(bp)
            inplanes = width * EXPANSION
        layers.append(blocks)
    p["layers"] = layers

    # CNNModel head: Linear(2048,1024,bias=False) -> Linear(1024,nclasses,bias=False)
    p["fc1_w"] = linear_w(2048, 1024)
    p["fc2_w"] = linear_w(1024, nclasses)
    return p


def preprocess_params(params):
    """One-time: fold BN into weights, relayout for the kernels, cast to bf16."""
    def fold_1x1(w, scale, shift):
        cout, cin = w.shape[0], w.shape[1]
        wk = w.reshape(cout, cin).T * scale[None, :]
        return wk.astype(jnp.bfloat16), shift.astype(jnp.float32)

    def fold_spatial(w, scale, shift):
        cout, cin, kh, kw = w.shape
        wt = jnp.transpose(w, (2, 3, 1, 0)).reshape(kh * kw, cin, cout)
        wt = wt * scale[None, None, :]
        return wt.astype(jnp.bfloat16), shift.astype(jnp.float32)

    def fold_im2col(w, scale, shift):
        cout, cin, kh, kw = w.shape
        wt = jnp.transpose(w, (2, 3, 1, 0)).reshape(kh * kw * cin, cout)
        wt = wt * scale[None, :]
        return wt.astype(jnp.bfloat16), shift.astype(jnp.float32)

    pp = {"conv1": fold_im2col(params["conv1_w"], params["bn1_scale"],
                               params["bn1_shift"])}
    layers = []
    for blocks in params["layers"]:
        lb = []
        for bp in blocks:
            nb = {
                "c1": fold_1x1(bp["w1"], bp["s1"], bp["b1"]),
                "c2": fold_spatial(bp["w2"], bp["s2"], bp["b2"]),
                "c3": fold_1x1(bp["w3"], bp["s3"], bp["b3"]),
            }
            if "wd" in bp:
                nb["cd"] = fold_1x1(bp["wd"], bp["sd"], bp["bd"])
            lb.append(nb)
        layers.append(lb)
    pp["layers"] = layers
    pp["fc1"] = params["fc1_w"].astype(jnp.bfloat16)
    pp["fc2"] = params["fc2_w"].astype(jnp.bfloat16)
    return pp


def cnn_model_forward(pp, x_nchw):
    # TODO(synk): BatchNorm runs in eval mode (running stats folded into the GEMM
    # epilogue); train-mode batch statistics are not replicated.
    x = jnp.transpose(x_nchw, (0, 2, 3, 1)).astype(jnp.bfloat16)   # NCHW -> NHWC bf16

    # Stem: 7x7/s2 conv (im2col, Cin=3), BN+ReLU fused in the GEMM epilogue.
    w, b = pp["conv1"]
    cols, (N, Ho, Wo) = _im2col(x, 7, 7, 2, 3)
    x = gemm_bias_act(cols, w, b, relu=True).reshape(N, Ho, Wo, 64)
    x = maxpool_3x3_s2_p1(x)

    for li, (_, nblocks, layer_stride) in enumerate(BLOCKS):
        for bi in range(nblocks):
            nb = pp["layers"][li][bi]
            stride = layer_stride if bi == 0 else 1
            identity = x
            w1, b1 = nb["c1"]
            out = conv1x1_bn(x, w1, b1, relu=True)
            w2, b2 = nb["c2"]
            out = conv_spatial_bn(out, w2, b2, kh=3, kw=3, stride=stride,
                                  pad=1, relu=True)
            if "cd" in nb:
                wd, bd = nb["cd"]
                identity = conv1x1_bn(x, wd, bd, stride=stride, relu=False)
            w3, b3 = nb["c3"]
            # residual add + ReLU fused into the third 1x1 GEMM's epilogue
            x = conv1x1_bn(out, w3, b3, relu=True, residual=identity)

    feat = global_avgpool(x)                                       # (N, 2048) f32
    zeros1 = jnp.zeros((pp["fc1"].shape[1],), jnp.float32)
    zeros2 = jnp.zeros((pp["fc2"].shape[1],), jnp.float32)
    h = gemm_bias_act(feat, pp["fc1"], zeros1, relu=False)         # (N, 1024)
    logits = gemm_bias_act(h, pp["fc2"], zeros2, relu=False,
                           out_dtype=jnp.float32)                  # (N, nclasses)
    return logits


# ----------------------------------------------------------------------------
# plain-JAX reference for the direct conv kernel (test only)
# ----------------------------------------------------------------------------
def _conv_ref(x, w_tap, bias, *, kh, kw, stride, pad, relu):
    N, H, W, C = x.shape
    s = stride
    xp = jnp.pad(x, ((0, 0), (pad, pad), (pad, pad), (0, 0)))
    Ho = (H + 2 * pad - kh) // s + 1
    Wo = (W + 2 * pad - kw) // s + 1
    acc = jnp.zeros((N, Ho, Wo, w_tap.shape[2]), jnp.float32)
    for i in range(kh):
        for j in range(kw):
            win = xp[:, i:i + s * Ho:s, j:j + s * Wo:s, :]
            acc = acc + jnp.einsum('nhwc,cd->nhwd', win, w_tap[i * kw + j])
    out = acc + bias[None, None, None, :]
    return jnp.maximum(out, 0.0) if relu else out


if __name__ == "__main__":
    key = jax.random.PRNGKey(0)
    k_param, k_x = jax.random.split(key)

    nclasses = 1000
    params = init_params(k_param, nclasses=nclasses)
    pp = preprocess_params(params)   # one-time BN fold + relayout + bf16 cast
    # 32x32 is the smallest spatial size that survives ResNet-50's 32x downsampling.
    x = jax.random.normal(k_x, (2, 3, 32, 32), jnp.float32)

    # --- sanity check: GEMM kernel vs reference (bf16 operands, f32 accumulation) ---
    a = jax.random.normal(jax.random.PRNGKey(1), (130, 200), jnp.float32)
    b = jax.random.normal(jax.random.PRNGKey(2), (200, 70), jnp.float32)
    bias = jax.random.normal(jax.random.PRNGKey(3), (70,), jnp.float32)
    got = gemm_bias_act(a, b, bias, relu=True, out_dtype=jnp.float32)
    a16 = a.astype(jnp.bfloat16).astype(jnp.float32)
    b16 = b.astype(jnp.bfloat16).astype(jnp.float32)
    want = jnp.maximum(a16 @ b16 + bias[None, :], 0.0)
    assert jnp.allclose(got, want, rtol=2e-2, atol=2e-2), "GEMM kernel mismatch"

    # --- sanity check: direct conv kernel (stride 2, phase-decomposed path) ---------
    xc = jax.random.normal(jax.random.PRNGKey(4), (2, 8, 8, 64), jnp.float32)
    wc = 0.05 * jax.random.normal(jax.random.PRNGKey(5), (9, 64, 128), jnp.float32)
    bc = 0.1 * jax.random.normal(jax.random.PRNGKey(6), (128,), jnp.float32)
    got_c = conv_spatial_bn(xc.astype(jnp.bfloat16), wc.astype(jnp.bfloat16), bc,
                            kh=3, kw=3, stride=2, pad=1, relu=True).astype(jnp.float32)
    want_c = _conv_ref(xc.astype(jnp.bfloat16).astype(jnp.float32),
                       wc.astype(jnp.bfloat16).astype(jnp.float32), bc,
                       kh=3, kw=3, stride=2, pad=1, relu=True)
    assert got_c.shape == want_c.shape, (got_c.shape, want_c.shape)
    assert jnp.allclose(got_c, want_c, rtol=5e-2, atol=5e-2), "conv kernel mismatch"

    # --- full forward ----------------------------------------------------------------
    fwd = jax.jit(cnn_model_forward)
    logits = jax.block_until_ready(fwd(pp, x))
    assert logits.shape == (2, nclasses), logits.shape
    assert bool(jnp.all(jnp.isfinite(logits)))
    print("KERNEL_OK")
</pallas_src>

<mosaic_0001>
module attributes {stable_mosaic.version = 11 : i64} {
  func.func @_gemm_kernel(%arg0: i32, %arg1: i32, %arg2: i32, %arg3: memref<128x256xbf16, #tpu.memory_space<vmem>>, %arg4: memref<256x128xbf16, #tpu.memory_space<vmem>>, %arg5: memref<1x128xf32, #tpu.memory_space<vmem>>, %arg6: memref<128x128xf32, #tpu.memory_space<vmem>>, %arg7: memref<128x128xf32, #tpu.memory_space<vmem>>) attributes {dimension_semantics = [#tpu.dimension_semantics<parallel>, #tpu.dimension_semantics<parallel>, #tpu.dimension_semantics<arbitrary>], iteration_bounds = array<i64: 2, 1, 1>, scalar_prefetch = 0 : i64, scratch_operands = 1 : i64, tpu.core_type = #tpu.core_type<tc>, window_params = [{transform_indices = @transform_0, window_bounds = array<i64: 128, 256>}, {transform_indices = @transform_1, window_bounds = array<i64: 256, 128>}, {transform_indices = @transform_2, window_bounds = array<i64: 1, 128>}, {transform_indices = @transform_3, window_bounds = array<i64: 128, 128>}]} {
    %c0_i32 = arith.constant 0 : i32
    %0 = arith.cmpi eq, %arg2, %c0_i32 : i32
    %1 = arith.extui %0 : i1 to i32
    %c0_i32_0 = arith.constant 0 : i32
    %2 = arith.cmpi ne, %1, %c0_i32_0 : i32
    scf.if %2 {
      %cst_10 = arith.constant 0.000000e+00 : f32
      %12 = vector.broadcast %cst_10 : f32 to vector<128x128xf32>
      %c0_11 = arith.constant 0 : index
      %c0_12 = arith.constant 0 : index
      %13 = vector.load %arg7[%c0_11, %c0_12] : memref<128x128xf32, #tpu.memory_space<vmem>>, vector<128x128xf32>
      tpu.vector_store %arg7[%c0_11, %c0_12], %12 {strides = array<i32>} : memref<128x128xf32, #tpu.memory_space<vmem>>, vector<128x128xf32>,
    } else {
    }
    %c0 = arith.constant 0 : index
    %c0_1 = arith.constant 0 : index
    %3 = vector.load %arg7[%c0, %c0_1] : memref<128x128xf32, #tpu.memory_space<vmem>>, vector<128x128xf32>
    %c0_2 = arith.constant 0 : index
    %c0_3 = arith.constant 0 : index
    %4 = vector.load %arg3[%c0_2, %c0_3] : memref<128x256xbf16, #tpu.memory_space<vmem>>, vector<128x256xbf16>
    %c0_4 = arith.constant 0 : index
    %c0_5 = arith.constant 0 : index
    %5 = vector.load %arg4[%c0_4, %c0_5] : memref<256x128xbf16, #tpu.memory_space<vmem>>, vector<256x128xbf16>
    %cst = arith.constant dense<0.000000e+00> : vector<128x128xf32>
    %6 = tpu.matmul %4, %5, %cst {dimension_numbers = #tpu.dot_dimension_numbers<[1], [0], [0], [1], [0, 0, 1, 1], [], []>} : vector<128x256xbf16>, vector<256x128xbf16>, vector<128x128xf32> -> vector<128x128xf32>
    %7 = arith.addf %3, %6 : vector<128x128xf32>
    %c0_6 = arith.constant 0 : index
    %c0_7 = arith.constant 0 : index
    %8 = vector.load %arg7[%c0_6, %c0_7] : memref<128x128xf32, #tpu.memory_space<vmem>>, vector<128x128xf32>
    tpu.vector_store %arg7[%c0_6, %c0_7], %7 {strides = array<i32>} : memref<128x128xf32, #tpu.memory_space<vmem>>, vector<128x128xf32>,
    %c0_i32_8 = arith.constant 0 : i32
    %9 = arith.cmpi eq, %arg2, %c0_i32_8 : i32
    %10 = arith.extui %9 : i1 to i32
    %c0_i32_9 = arith.constant 0 : i32
    %11 = arith.cmpi ne, %10, %c0_i32_9 : i32
    scf.if %11 {
      %c0_10 = arith.constant 0 : index
      %c0_11 = arith.constant 0 : index
      %12 = vector.load %arg7[%c0_10, %c0_11] : memref<128x128xf32, #tpu.memory_space<vmem>>, vector<128x128xf32>
      %c0_12 = arith.constant 0 : index
      %c0_13 = arith.constant 0 : index
      %13 = vector.load %arg5[%c0_12, %c0_13] : memref<1x128xf32, #tpu.memory_space<vmem>>, vector<1x128xf32>
      %14 = vector.broadcast %13 : vector<1x128xf32> to vector<128x128xf32>
      %15 = arith.addf %12, %14 : vector<128x128xf32>
      %cst_14 = arith.constant 0.000000e+00 : f32
      %16 = vector.broadcast %cst_14 : f32 to vector<128x128xf32>
      %17 = arith.maximumf %15, %16 : vector<128x128xf32>
      %c0_15 = arith.constant 0 : index
      %c0_16 = arith.constant 0 : index
      %18 = vector.load %arg6[%c0_15, %c0_16] : memref<128x128xf32, #tpu.memory_space<vmem>>, vector<128x128xf32>
      tpu.vector_store %arg6[%c0_15, %c0_16], %17 {strides = array<i32>} : memref<128x128xf32, #tpu.memory_space<vmem>>, vector<128x128xf32>,
    } else {
    }
    return
  }
  func.func @transform_0(%arg0: i32, %arg1: i32, %arg2: i32) -> (i32, i32) {
    %c0_i32 = arith.constant 0 : i32
    return %arg0, %arg2 : i32, i32
  }
  func.func @transform_1(%arg0: i32, %arg1: i32, %arg2: i32) -> (i32, i32) {
    %c0_i32 = arith.constant 0 : i32
    return %arg2, %arg1 : i32, i32
  }
  func.func @transform_2(%arg0: i32, %arg1: i32, %arg2: i32) -> (i32, i32) {
    %c0_i32 = arith.constant 0 : i32
    %c0_i32_0 = arith.constant 0 : i32
    return %c0_i32, %arg1 : i32, i32
  }
  func.func @transform_3(%arg0: i32, %arg1: i32, %arg2: i32) -> (i32, i32) {
    %c0_i32 = arith.constant 0 : i32
    return %arg0, %arg1 : i32, i32
  }
}

</mosaic_0001>

<llo_original>
// kernel: tpu_custom_call.1
$region0: #{tpu_custom_call.1}
  #allocation0 [shape = 'u32[]', space=smem, size = 0x4, offset = 0x4, fixed_abs, tag = 'smem constant byte address 0x4 - core index']
  #allocation1 [shape = 'u32[144,128]{1,0:T(1,128)}', space=vmem, size = 0x12000, scoped, tag = 'internal scratch']
  #allocation2 [shape = 'f32[128,128]{1,0:T(8,128)}', space=vmem, size = 0x10000, scoped, tag = 'scratch operand']
  %s0 = inlined_call_operand.hbm [shape: bf16[256,256], index: 0, kind: input, shape index: {}]
  %s1 = inlined_call_operand.hbm [shape: bf16[256,128], index: 1, kind: input, shape index: {}]
  %s2 = inlined_call_operand.vmem [shape: f32[1,128], index: 2, kind: input, shape index: {}]
  %s3 = inlined_call_operand.hbm [shape: f32[256,128], index: 3, kind: output, shape index: {}]
  %s4 = sld [smem:[#allocation0]]
  $region61: #{tpu_custom_call.1} parent=0
    _
  %s6 = ssub.s32 1, %s4
  %s7 = scalar_select 0, %s6, %s4
  $region1: #{tpu_custom_call.1} parent=0
    #allocation3 [shape = 'u8[131072]{0}', space=vmem, size = 0x20000, scoped, tag = 'input window, operand 0']
    #allocation4 [shape = 's32[2]{0}', space=sflag, size = 0x8, scoped, tag = 'scoped memory for tpu_custom_call.1']
    #allocation5 [shape = 's32[2]{0}', space=sflag, size = 0x8, scoped, tag = 'scoped memory for tpu_custom_call.1']
    #allocation6 [shape = 'u8[65536]{0}', space=vmem, size = 0x10000, scoped, tag = 'input window, operand 1, single buffered']
    #allocation7 [shape = 's32[1]{0}', space=sflag, size = 0x4, scoped, tag = 'scoped memory for tpu_custom_call.1']
    #allocation8 [shape = 'u8[131072]{0}', space=vmem, size = 0x20000, scoped, tag = 'output window, operand 0']
    %8 = vsyncpa [#allocation4], 0
    %s9 = scalar_lea.sflag [#allocation4], 1
    %10 = vsyncpa %s9, 0
    %11 = vsyncpa [#allocation7], 0
    %12 = vsyncpa [#allocation5], 0
    %s13 = scalar_lea.sflag [#allocation5], 1
    %14 = vsyncpa %s13, 0
    loop: start=0, step=1, limit=4
    $region2: #{tpu_custom_call.1} parent=1 // loop_pre_header
      _
    $region3: #{tpu_custom_call.1} parent=1 // loop_header
      %s16 = sphi 0, %s20
      %p17 = scmp.ge.s32.totalorder %s16, 4
      %s23 = sphi 0, %s42
      %s24 = sphi 0, %s38
      %s25 = sphi 0, %s34
      %s26 = sphi 0, %s23
      %s27 = sphi 0, %s24
      %s28 = sphi 0, %s25
      %s29 = sphi 0, %s26
      %s30 = sphi 0, %s27
      %s31 = sphi 0, %s28
      %s47 = sphi 0, %s49
      %s50 = sphi 0, %s47
      %s51 = sphi 0, %s50
      %s67 = sphi 0, %s51
      %s75 = sphi 0, %s77
      %s78 = sphi 0, %s75
      %s79 = sphi 0, %s78
      %s95 = sphi 0, %s79
      %s101 = sphi 0, %s103
      %s104 = sphi 0, %s101
      %s105 = sphi 0, %s104
      %s121 = sphi 0, %s105
      %s129 = sphi 0, %s131
      %s132 = sphi 0, %s129
      %s133 = sphi 0, %s132
      %s149 = sphi 0, %s133
    $region4: #{tpu_custom_call.1} parent=1 // loop_header_branch
      %19 = sbr.rel (%p17) target = $region8
    $region5: #{tpu_custom_call.1} parent=1 // loop_body
      %s21 = ssub.s32 %s16, 1
      %s22 = ssub.s32 %s16, 2
      %s32 = sadd.s32 1, %s25
      %p33 = scmp.ge.s32.totalorder %s32, 1
      %s34 = scalar_select %p33, 0, %s32
      %s35 = sadd.s32 1, %s24
      %s36 = scalar_select %p33, %s35, %s24
      %p37 = scmp.ge.s32.totalorder %s36, 1
      %s38 = scalar_select %p37, 0, %s36
      %s39 = sadd.s32 1, %s23
      %s40 = scalar_select %p37, %s39, %s23
      %p41 = scmp.ge.s32.totalorder %s40, 2
      %s42 = scalar_select %p41, 0, %s40
      %s43 = ssub.s32 %s23, %s42
      %s44 = ssub.s32 %s25, %s34
      %s45 = sor.u32 %s43, %s44
      %p46 = scmp.eq.s32.totalorder %s45, 0
      %s48 = sadd.s32 %s47, 1
      %s49 = scalar_select %p46, %s47, %s48
      %p52 = pneg %p46
      %p53 = scmp.eq.s32.totalorder %s16, 1
      %p54 = por %p52, %p53
      %p55 = scmp.ne.s32.totalorder %s47, %s50
      %p56 = scmp.eq.s32.totalorder %s16, 0
      %p57 = por %p55, %p56
      %p58 = scmp.ne.s32.totalorder %s47, %s50
      %p59 = scmp.eq.s32.totalorder %s21, 1
      %p60 = por %p58, %p59
      %p61 = scmp.ne.s32.totalorder %s50, %s51
      %p62 = scmp.eq.s32.totalorder %s21, 0
      %p63 = por %p61, %p62
      %p64 = scmp.ne.s32.totalorder %s50, %s51
      %p65 = scmp.eq.s32.totalorder %s22, 1
      %p66 = por %p64, %p65
      %p68 = scmp.ne.s32.totalorder %s51, %s67
      %p69 = scmp.eq.s32.totalorder %s22, 0
      %p70 = por %p68, %p69
      %s71 = ssub.s32 %s25, %s34
      %s72 = ssub.s32 %s24, %s38
      %s73 = sor.u32 %s71, %s72
      %p74 = scmp.eq.s32.totalorder %s73, 0
      %s76 = sadd.s32 %s75, 1
      %s77 = scalar_select %p74, %s75, %s76
      %p80 = pneg %p74
      %p81 = scmp.eq.s32.totalorder %s16, 1
      %p82 = por %p80, %p81
      %p83 = scmp.ne.s32.totalorder %s75, %s78
      %p84 = scmp.eq.s32.totalorder %s16, 0
      %p85 = por %p83, %p84
      %p86 = scmp.ne.s32.totalorder %s75, %s78
      %p87 = scmp.eq.s32.totalorder %s21, 1
      %p88 = por %p86, %p87
      %p89 = scmp.ne.s32.totalorder %s78, %s79
      %p90 = scmp.eq.s32.totalorder %s21, 0
      %p91 = por %p89, %p90
      %p92 = scmp.ne.s32.totalorder %s78, %s79
      %p93 = scmp.eq.s32.totalorder %s22, 1
      %p94 = por %p92, %p93
      %p96 = scmp.ne.s32.totalorder %s79, %s95
      %p97 = scmp.eq.s32.totalorder %s22, 0
      %p98 = por %p96, %p97
      %s99 = ssub.s32 %s24, %s38
      %p100 = scmp.eq.s32.totalorder %s99, 0
      %s102 = sadd.s32 %s101, 1
      %s103 = scalar_select %p100, %s101, %s102
      %p106 = pneg %p100
      %p107 = scmp.eq.s32.totalorder %s16, 1
      %p108 = por %p106, %p107
      %p109 = scmp.ne.s32.totalorder %s101, %s104
      %p110 = scmp.eq.s32.totalorder %s16, 0
      %p111 = por %p109, %p110
      %p112 = scmp.ne.s32.totalorder %s101, %s104
      %p113 = scmp.eq.s32.totalorder %s21, 1
      %p114 = por %p112, %p113
      %p115 = scmp.ne.s32.totalorder %s104, %s105
      %p116 = scmp.eq.s32.totalorder %s21, 0
      %p117 = por %p115, %p116
      %p118 = scmp.ne.s32.totalorder %s104, %s105
      %p119 = scmp.eq.s32.totalorder %s22, 1
      %p120 = por %p118, %p119
      %p122 = scmp.ne.s32.totalorder %s105, %s121
      %p123 = scmp.eq.s32.totalorder %s22, 0
      %p124 = por %p122, %p123
      %s125 = ssub.s32 %s23, %s42
      %s126 = ssub.s32 %s24, %s38
      %s127 = sor.u32 %s125, %s126
      %p128 = scmp.eq.s32.totalorder %s127, 0
      %s130 = sadd.s32 %s129, 1
      %s131 = scalar_select %p128, %s129, %s130
      %p134 = pneg %p128
      %p135 = scmp.eq.s32.totalorder %s16, 1
      %p136 = por %p134, %p135
      %p137 = scmp.ne.s32.totalorder %s129, %s132
      %p138 = scmp.eq.s32.totalorder %s16, 0
      %p139 = por %p137, %p138
      %p140 = scmp.ne.s32.totalorder %s129, %s132
      %p141 = scmp.eq.s32.totalorder %s21, 1
      %p142 = por %p140, %p141
      %p143 = scmp.ne.s32.totalorder %s132, %s133
      %p144 = scmp.eq.s32.totalorder %s21, 0
      %p145 = por %p143, %p144
      %p146 = scmp.ne.s32.totalorder %s132, %s133
      %p147 = scmp.eq.s32.totalorder %s22, 1
      %p148 = por %p146, %p147
      %p150 = scmp.ne.s32.totalorder %s133, %s149
      %p151 = scmp.eq.s32.totalorder %s22, 0
      %p152 = por %p150, %p151
      %p153 = scmp.le.s32.totalorder 1, %s16
      %p154 = scmp.lt.s32.totalorder %s16, 3
      %p155 = pnand %p153, %p154
      %p156 = pneg %p155
      // Predicated region
      $region9: #{tpu_custom_call.1} parent=5 // pred_check
        _
      $region10: #{tpu_custom_call.1} parent=5 // pred_check_branch
        %158 = sbr.rel (%p155) target = $region12
      $region11: #{tpu_custom_call.1} parent=5 // pred_region
        %s159 = ssub.s32 %s16, 1
        // Predicated region
        $region13: #{tpu_custom_call.1} parent=11 // pred_check
          %p160 = pneg %p91
        $region14: #{tpu_custom_call.1} parent=11 // pred_check_branch
          %162 = sbr.rel (%p160) target = $region16
        $region15: #{tpu_custom_call.1} parent=11 // pred_region
          %s163 = smul.u32 32, %s28
          %s165 = ssub.s32 2048, 2048
          %166 = vsyncadd [#allocation7], %s165
          %s167 = sadd.s32 %s27, %s163
          %s168 = smul.addr %s167, 64
          %s169 = scalar_lea.hbm %s1, %s168
          %s170 = sshll.u32 [#allocation6], 4
          %s171 = int_to_ptr.vmem [resolvable:$true] %s170
          %176 = dma.hbm_to_vmem [thread:$0]  %s169, 2048, %s171, [#allocation7], 64, 64, 4
        $region16: #{tpu_custom_call.1} parent=11 // pred_fallthru
          _
        // Predicated region
        $region17: #{tpu_custom_call.1} parent=11 // pred_check
          %p177 = pneg %p117
        $region18: #{tpu_custom_call.1} parent=11 // pred_check_branch
          %179 = sbr.rel (%p177) target = $region20
        $region19: #{tpu_custom_call.1} parent=11 // pred_region
          %p180 = scmp.lt.s32.totalorder %s27, 0
          %s181 = scalar_select %p180, %s27, 0
          %s182 = scalar_lea.vmem %s2, %s181
        $region20: #{tpu_custom_call.1} parent=11 // pred_fallthru
          _
      $region12: #{tpu_custom_call.1} parent=5 // pred_fallthru
        _
      %p183 = scmp.lt.s32.totalorder %s16, 2
      // Predicated region
      $region21: #{tpu_custom_call.1} parent=5 // pred_check
        %p184 = pneg %p183
      $region22: #{tpu_custom_call.1} parent=5 // pred_check_branch
        %186 = sbr.rel (%p184) target = $region24
      $region23: #{tpu_custom_call.1} parent=5 // pred_region
        // Predicated region
        $region25: #{tpu_custom_call.1} parent=23 // pred_check
          %p187 = pneg %p57
        $region26: #{tpu_custom_call.1} parent=23 // pred_check_branch
          %189 = sbr.rel (%p187) target = $region28
        $region27: #{tpu_custom_call.1} parent=23 // pred_region
          %s190 = sand.u32 %s47, 1
          %s191 = scalar_lea.sflag [#allocation4], %s190
          %s192 = sand.u32 %s47, 1
          %s193 = smul.addr %s192, 128
          %s194 = scalar_lea.vmem [#allocation3], %s193
          %s195 = smul.u32 16, %s23
          %s196 = smul.u32 2, %s25
          %s198 = ssub.s32 2048, 2048
          %199 = vsyncadd %s191, %s198
          %s200 = smul.addr %s195, 2
          %s201 = sadd.s32 %s196, %s200
          %s202 = smul.addr %s201, 64
          %s203 = scalar_lea.hbm %s0, %s202
          %s204 = sshll.u32 %s194, 4
          %s205 = int_to_ptr.vmem [resolvable:$true] %s204
          %210 = dma.hbm_to_vmem [thread:$0]  %s203, 2048, %s205, %s191, 128, 128, 8
        $region28: #{tpu_custom_call.1} parent=23 // pred_fallthru
          _
      $region24: #{tpu_custom_call.1} parent=5 // pred_fallthru
        _
      %p211 = scmp.le.s32.totalorder 1, %s16
      %p212 = scmp.lt.s32.totalorder %s16, 3
      %p213 = pnand %p211, %p212
      %p214 = pneg %p213
      // Predicated region
      $region29: #{tpu_custom_call.1} parent=5 // pred_check
        _
      $region30: #{tpu_custom_call.1} parent=5 // pred_check_branch
        %216 = sbr.rel (%p213) target = $region32
      $region31: #{tpu_custom_call.1} parent=5 // pred_region
        %s217 = ssub.s32 %s16, 1
        %s218 = sand.u32 %s50, 1
        %s219 = scalar_lea.sflag [#allocation4], %s218
        %s220 = sand.u32 %s50, 1
        %s221 = smul.addr %s220, 128
        %s222 = scalar_lea.vmem [#allocation3], %s221
        // Predicated region
        $region33: #{tpu_custom_call.1} parent=31 // pred_check
          %p223 = pneg %p63
        $region34: #{tpu_custom_call.1} parent=31 // pred_check_branch
          %225 = sbr.rel (%p223) target = $region36
        $region35: #{tpu_custom_call.1} parent=31 // pred_region
          %226 = dma.done %s219, 2048
        $region36: #{tpu_custom_call.1} parent=31 // pred_fallthru
          _
        // Predicated region
        $region37: #{tpu_custom_call.1} parent=31 // pred_check
          %p227 = pneg %p91
        $region38: #{tpu_custom_call.1} parent=31 // pred_check_branch
          %229 = sbr.rel (%p227) target = $region40
        $region39: #{tpu_custom_call.1} parent=31 // pred_region
          %230 = dma.done [#allocation7], 2048
        $region40: #{tpu_custom_call.1} parent=31 // pred_fallthru
          _
        %s231 = sand.u32 %s50, 1
        %s232 = scalar_lea.sflag [#allocation4], %s231
        %s233 = sand.u32 %s50, 1
        %s234 = smul.addr %s233, 128
        %s235 = scalar_lea.vmem [#allocation3], %s234
        %p236 = pneg %p63
        %p237 = pneg %p60
        %p238 = pneg %p91
        %p239 = pneg %p88
        %p240 = scmp.lt.s32.totalorder %s27, 0
        %s241 = scalar_select %p240, %s27, 0
        %s242 = scalar_lea.vmem %s2, %s241
        %p243 = pneg %p117
        %p244 = pneg %p114
        %p245 = pneg %p145
        %p246 = pneg %p142
        %s247 = sand.u32 %s132, 1
        %s248 = scalar_lea.sflag [#allocation5], %s247
        %s249 = sand.u32 %s132, 1
        %s250 = smul.addr %s249, 128
        %s251 = scalar_lea.vmem [#allocation8], %s250
        %s252 = smul.u32 16, %s26
        %s253 = smul.u32 2, %s28
        %s254 = smul.u32 32, %s28
        %p255 = scmp.lt.s32.totalorder %s27, 0
        %s256 = scalar_select %p255, %s27, 0
        %s257 = scalar_lea.vmem %s2, %s256
        %s258 = smul.u32 16, %s26
        %p260 = scmp.eq.s32.totalorder %s28, 0
        // Predicated region
        $region41: #{tpu_custom_call.1} parent=31 // pred_check
          %p261 = pneg %p260
        $region42: #{tpu_custom_call.1} parent=31 // pred_check_branch
          %263 = sbr.rel (%p261) target = $region44
        $region43: #{tpu_custom_call.1} parent=31 // pred_region
          %264 = vst [vmem:[#allocation2] sm:$0xff] 0.0
          %265 = vst [vmem:[#allocation2 + $0x8] sm:$0xff] 0.0
          %266 = vst [vmem:[#allocation2 + $0x10] sm:$0xff] 0.0
          %267 = vst [vmem:[#allocation2 + $0x18] sm:$0xff] 0.0
          %268 = vst [vmem:[#allocation2 + $0x20] sm:$0xff] 0.0
          %269 = vst [vmem:[#allocation2 + $0x28] sm:$0xff] 0.0
          %270 = vst [vmem:[#allocation2 + $0x30] sm:$0xff] 0.0
          %271 = vst [vmem:[#allocation2 + $0x38] sm:$0xff] 0.0
          %272 = vst [vmem:[#allocation2 + $0x40] sm:$0xff] 0.0
          %273 = vst [vmem:[#allocation2 + $0x48] sm:$0xff] 0.0
          %274 = vst [vmem:[#allocation2 + $0x50] sm:$0xff] 0.0
          %275 = vst [vmem:[#allocation2 + $0x58] sm:$0xff] 0.0
          %276 = vst [vmem:[#allocation2 + $0x60] sm:$0xff] 0.0
          %277 = vst [vmem:[#allocation2 + $0x68] sm:$0xff] 0.0
          %278 = vst [vmem:[#allocation2 + $0x70] sm:$0xff] 0.0
          %279 = vst [vmem:[#allocation2 + $0x78] sm:$0xff] 0.0
        $region44: #{tpu_custom_call.1} parent=31 // pred_fallthru
          _
        %v280 = vld [vmem:[#allocation2] sm:$0xff]
        %v281 = vld [vmem:[#allocation2 + $0x8] sm:$0xff]
        %v282 = vld [vmem:[#allocation2 + $0x10] sm:$0xff]
        %v283 = vld [vmem:[#allocation2 + $0x18] sm:$0xff]
        %v284 = vld [vmem:[#allocation2 + $0x20] sm:$0xff]
        %v285 = vld [vmem:[#allocation2 + $0x28] sm:$0xff]
        %v286 = vld [vmem:[#allocation2 + $0x30] sm:$0xff]
        %v287 = vld [vmem:[#allocation2 + $0x38] sm:$0xff]
        %v288 = vld [vmem:[#allocation2 + $0x40] sm:$0xff]
        %v289 = vld [vmem:[#allocation2 + $0x48] sm:$0xff]
        %v290 = vld [vmem:[#allocation2 + $0x50] sm:$0xff]
        %v291 = vld [vmem:[#allocation2 + $0x58] sm:$0xff]
        %v292 = vld [vmem:[#allocation2 + $0x60] sm:$0xff]
        %v293 = vld [vmem:[#allocation2 + $0x68] sm:$0xff]
        %v294 = vld [vmem:[#allocation2 + $0x70] sm:$0xff]
        %v295 = vld [vmem:[#allocation2 + $0x78] sm:$0xff]
        %v296 = vld [vmem:[%s222] sm:$0xff]
        %v297 = vld [vmem:[%s222 + $0x8] sm:$0xff]
        %v298 = vld [vmem:[%s222 + $0x10] sm:$0xff]
        %v299 = vld [vmem:[%s222 + $0x18] sm:$0xff]
        %v300 = vld [vmem:[%s222 + $0x20] sm:$0xff]
        %v301 = vld [vmem:[%s222 + $0x28] sm:$0xff]
        %v302 = vld [vmem:[%s222 + $0x30] sm:$0xff]
        %v303 = vld [vmem:[%s222 + $0x38] sm:$0xff]
        %v304 = vld [vmem:[%s222 + $0x40] sm:$0xff]
        %v305 = vld [vmem:[%s222 + $0x48] sm:$0xff]
        %v306 = vld [vmem:[%s222 + $0x50] sm:$0xff]
        %v307 = vld [vmem:[%s222 + $0x58] sm:$0xff]
        %v308 = vld [vmem:[%s222 + $0x60] sm:$0xff]
        %v309 = vld [vmem:[%s222 + $0x68] sm:$0xff]
        %v310 = vld [vmem:[%s222 + $0x70] sm:$0xff]
        %v311 = vld [vmem:[%s222 + $0x78] sm:$0xff]
        %v312 = vld [vmem:[#allocation6] sm:$0xf]
        %v313 = vld [vmem:[#allocation6 + $0x4] sm:$0xf]
        %v314 = vld [vmem:[#allocation6 + $0x8] sm:$0xf]
        %v315 = vld [vmem:[#allocation6 + $0xc] sm:$0xf]
        %v316 = vld [vmem:[#allocation6 + $0x10] sm:$0xf]
        %v317 = vld [vmem:[#allocation6 + $0x14] sm:$0xf]
        %v318 = vld [vmem:[#allocation6 + $0x18] sm:$0xf]
        %v319 = vld [vmem:[#allocation6 + $0x1c] sm:$0xf]
        %v320 = vld [vmem:[#allocation6 + $0x20] sm:$0xf]
        %v321 = vld [vmem:[#allocation6 + $0x24] sm:$0xf]
        %v322 = vld [vmem:[#allocation6 + $0x28] sm:$0xf]
        %v323 = vld [vmem:[#allocation6 + $0x2c] sm:$0xf]
        %v324 = vld [vmem:[#allocation6 + $0x30] sm:$0xf]
        %v325 = vld [vmem:[#allocation6 + $0x34] sm:$0xf]
        %v326 = vld [vmem:[#allocation6 + $0x38] sm:$0xf]
        %v327 = vld [vmem:[#allocation6 + $0x3c] sm:$0xf]
        %v328 = vld [vmem:[#allocation6 + $0x40] sm:$0xf]
        %v329 = vld [vmem:[#allocation6 + $0x44] sm:$0xf]
        %v330 = vld [vmem:[#allocation6 + $0x48] sm:$0xf]
        %v331 = vld [vmem:[#allocation6 + $0x4c] sm:$0xf]
        %v332 = vld [vmem:[#allocation6 + $0x50] sm:$0xf]
        %v333 = vld [vmem:[#allocation6 + $0x54] sm:$0xf]
        %v334 = vld [vmem:[#allocation6 + $0x58] sm:$0xf]
        %v335 = vld [vmem:[#allocation6 + $0x5c] sm:$0xf]
        %v336 = vld [vmem:[#allocation6 + $0x60] sm:$0xf]
        %v337 = vld [vmem:[#allocation6 + $0x64] sm:$0xf]
        %v338 = vld [vmem:[#allocation6 + $0x68] sm:$0xf]
        %v339 = vld [vmem:[#allocation6 + $0x6c] sm:$0xf]
        %v340 = vld [vmem:[#allocation6 + $0x70] sm:$0xf]
        %v341 = vld [vmem:[#allocation6 + $0x74] sm:$0xf]
        %v342 = vld [vmem:[#allocation6 + $0x78] sm:$0xf]
        %v343 = vld [vmem:[#allocation6 + $0x7c] sm:$0xf]
        %v360 = vunpack.c.l.b16 %v296
        %v361 = vunpack.c.h.b16 %v296
        %v362 = vunpack.c.l.b16 %v297
        %v363 = vunpack.c.h.b16 %v297
        %v364 = vunpack.c.l.b16 %v298
        %v365 = vunpack.c.h.b16 %v298
        %v366 = vunpack.c.l.b16 %v299
        %v367 = vunpack.c.h.b16 %v299
        %v368 = vunpack.c.l.b16 %v300
        %v369 = vunpack.c.h.b16 %v300
        %v370 = vunpack.c.l.b16 %v301
        %v371 = vunpack.c.h.b16 %v301
        %v372 = vunpack.c.l.b16 %v302
        %v373 = vunpack.c.h.b16 %v302
        %v374 = vunpack.c.l.b16 %v303
        %v375 = vunpack.c.h.b16 %v303
        %v376 = vunpack.c.l.b16 %v304
        %v377 = vunpack.c.h.b16 %v304
        %v378 = vunpack.c.l.b16 %v305
        %v379 = vunpack.c.h.b16 %v305
        %v380 = vunpack.c.l.b16 %v306
        %v381 = vunpack.c.h.b16 %v306
        %v382 = vunpack.c.l.b16 %v307
        %v383 = vunpack.c.h.b16 %v307
        %v384 = vunpack.c.l.b16 %v308
        %v385 = vunpack.c.h.b16 %v308
        %v386 = vunpack.c.l.b16 %v309
        %v387 = vunpack.c.h.b16 %v309
        %v388 = vunpack.c.l.b16 %v310
        %v389 = vunpack.c.h.b16 %v310
        %v390 = vunpack.c.l.b16 %v311
        %v391 = vunpack.c.h.b16 %v311
        %v392 = vpack.c.b16 %v362, %v360
        %v393 = vpack.c.b16 %v363, %v361
        %v394 = vpack.c.b16 %v366, %v364
        %v395 = vpack.c.b16 %v367, %v365
        %v396 = vpack.c.b16 %v370, %v368
        %v397 = vpack.c.b16 %v371, %v369
        %v398 = vpack.c.b16 %v374, %v372
        %v399 = vpack.c.b16 %v375, %v373
        %v400 = vpack.c.b16 %v378, %v376
        %v401 = vpack.c.b16 %v379, %v377
        %v402 = vpack.c.b16 %v382, %v380
        %v403 = vpack.c.b16 %v383, %v381
        %v404 = vpack.c.b16 %v386, %v384
        %v405 = vpack.c.b16 %v387, %v385
        %v406 = vpack.c.b16 %v390, %v388
        %v407 = vpack.c.b16 %v391, %v389
        %v456 = vunpack.c.l.b16 %v312
        %v457 = vunpack.c.l.b16 %v313
        %v458 = vunpack.c.l.b16 %v314
        %v459 = vunpack.c.l.b16 %v315
        %v460 = vunpack.c.l.b16 %v316
        %v461 = vunpack.c.l.b16 %v317
        %v462 = vunpack.c.l.b16 %v318
        %v463 = vunpack.c.l.b16 %v319
        %v464 = vunpack.c.l.b16 %v320
        %v465 = vunpack.c.l.b16 %v321
        %v466 = vunpack.c.l.b16 %v322
        %v467 = vunpack.c.l.b16 %v323
        %v468 = vunpack.c.l.b16 %v324
        %v469 = vunpack.c.l.b16 %v325
        %v470 = vunpack.c.l.b16 %v326
        %v471 = vunpack.c.l.b16 %v327
        %v472 = vunpack.c.l.b16 %v328
        %v473 = vunpack.c.l.b16 %v329
        %v474 = vunpack.c.l.b16 %v330
        %v475 = vunpack.c.l.b16 %v331
        %v476 = vunpack.c.l.b16 %v332
        %v477 = vunpack.c.l.b16 %v333
        %v478 = vunpack.c.l.b16 %v334
        %v479 = vunpack.c.l.b16 %v335
        %v480 = vunpack.c.l.b16 %v336
        %v481 = vunpack.c.l.b16 %v337
        %v482 = vunpack.c.l.b16 %v338
        %v483 = vunpack.c.l.b16 %v339
        %v484 = vunpack.c.l.b16 %v340
        %v485 = vunpack.c.l.b16 %v341
        %v486 = vunpack.c.l.b16 %v342
        %v487 = vunpack.c.l.b16 %v343
        %v488 = vpack.c.b16 %v457, %v456
        %v489 = vpack.c.b16 %v459, %v458
        %v490 = vpack.c.b16 %v461, %v460
        %v491 = vpack.c.b16 %v463, %v462
        %v492 = vpack.c.b16 %v465, %v464
        %v493 = vpack.c.b16 %v467, %v466
        %v494 = vpack.c.b16 %v469, %v468
        %v495 = vpack.c.b16 %v471, %v470
        %v496 = vpack.c.b16 %v473, %v472
        %v497 = vpack.c.b16 %v475, %v474
        %v498 = vpack.c.b16 %v477, %v476
        %v499 = vpack.c.b16 %v479, %v478
        %v500 = vpack.c.b16 %v481, %v480
        %v501 = vpack.c.b16 %v483, %v482
        %v502 = vpack.c.b16 %v485, %v484
        %v503 = vpack.c.b16 %v487, %v486
        %520 = vmatprep.subr.bf16.mxu0 0
        %521 = vmatpush1.bf16.msra.mxu0 %v488
        %522 = vmatprep.subr.bf16.mxu0 0
        %523 = vmatpush1.bf16.msra.mxu0 %v489
        %524 = vmatprep.subr.bf16.mxu0 0
        %525 = vmatpush1.bf16.msra.mxu0 %v490
        %526 = vmatprep.subr.bf16.mxu0 0
        %527 = vmatpush1.bf16.msra.mxu0 %v491
        %528 = vmatprep.subr.bf16.mxu0 0
        %529 = vmatpush1.bf16.msra.mxu0 %v492
        %530 = vmatprep.subr.bf16.mxu0 0
        %531 = vmatpush1.bf16.msra.mxu0 %v493
        %532 = vmatprep.subr.bf16.mxu0 0
        %533 = vmatpush1.bf16.msra.mxu0 %v494
        %534 = vmatprep.subr.bf16.mxu0 0
        %535 = vmatpush1.bf16.msra.mxu0 %v495
        %536 = vmatprep.subr.bf16.mxu0 0
        %537 = vmatpush1.bf16.msra.mxu0 %v496
        %538 = vmatprep.subr.bf16.mxu0 0
        %539 = vmatpush1.bf16.msra.mxu0 %v497
        %540 = vmatprep.subr.bf16.mxu0 0
        %541 = vmatpush1.bf16.msra.mxu0 %v498
        %542 = vmatprep.subr.bf16.mxu0 0
        %543 = vmatpush1.bf16.msra.mxu0 %v499
        %544 = vmatprep.subr.bf16.mxu0 0
        %545 = vmatpush1.bf16.msra.mxu0 %v500
        %546 = vmatprep.subr.bf16.mxu0 0
        %547 = vmatpush1.bf16.msra.mxu0 %v501
        %548 = vmatprep.subr.bf16.mxu0 0
        %549 = vmatpush1.bf16.msra.mxu0 %v502
        %550 = vmatprep.subr.bf16.mxu0 0
        %551 = vmatpush1.bf16.msra.mxu0 %v503
        %552 = vmatprep.mubr.bf16.mxu0 %v393
        %553 = vmatmul.mubr.bf16.gmra.mrb[0].mxu0 %v392
        %v554 = vpop.f32.mrb[0].mxu0
        %v555 = vadd.f32 0.0, %v554
        %v556 = vpop.f32.mrb[0].mxu0
        %v557 = vpop.f32.mrb[0].mxu0
        %v558 = vadd.f32 0.0, %v557
        %v559 = vpop.f32.mrb[0].mxu0
        %560 = vmatprep.mubr.bf16.mxu0 %v395
        %561 = vmatmul.mubr.bf16.gmra.mrb[0].mxu0 %v394
        %v562 = vpop.f32.mrb[0].mxu0
        %v563 = vadd.f32 0.0, %v562
        %v564 = vpop.f32.mrb[0].mxu0
        %v565 = vpop.f32.mrb[0].mxu0
        %v566 = vadd.f32 0.0, %v565
        %v567 = vpop.f32.mrb[0].mxu0
        %568 = vmatprep.mubr.bf16.mxu0 %v397
        %569 = vmatmul.mubr.bf16.gmra.mrb[0].mxu0 %v396
        %v570 = vpop.f32.mrb[0].mxu0
        %v571 = vadd.f32 0.0, %v570
        %v572 = vpop.f32.mrb[0].mxu0
        %v573 = vpop.f32.mrb[0].mxu0
        %v574 = vadd.f32 0.0, %v573
        %v575 = vpop.f32.mrb[0].mxu0
        %576 = vmatprep.mubr.bf16.mxu0 %v399
        %577 = vmatmul.mubr.bf16.gmra.mrb[0].mxu0 %v398
        %v578 = vpop.f32.mrb[0].mxu0
        %v579 = vadd.f32 0.0, %v578
        %v580 = vpop.f32.mrb[0].mxu0
        %v581 = vpop.f32.mrb[0].mxu0
        %v582 = vadd.f32 0.0, %v581
        %v583 = vpop.f32.mrb[0].mxu0
        %584 = vmatprep.mubr.bf16.mxu0 %v401
        %585 = vmatmul.mubr.bf16.gmra.mrb[0].mxu0 %v400
        %v586 = vpop.f32.mrb[0].mxu0
        %v587 = vadd.f32 0.0, %v586
        %v588 = vpop.f32.mrb[0].mxu0
        %v589 = vpop.f32.mrb[0].mxu0
        %v590 = vadd.f32 0.0, %v589
        %v591 = vpop.f32.mrb[0].mxu0
        %592 = vmatprep.mubr.bf16.mxu0 %v403
        %593 = vmatmul.mubr.bf16.gmra.mrb[0].mxu0 %v402
        %v594 = vpop.f32.mrb[0].mxu0
        %v595 = vadd.f32 0.0, %v594
        %v596 = vpop.f32.mrb[0].mxu0
        %v597 = vpop.f32.mrb[0].mxu0
        %v598 = vadd.f32 0.0, %v597
        %v599 = vpop.f32.mrb[0].mxu0
        %600 = vmatprep.mubr.bf16.mxu0 %v405
        %601 = vmatmul.mubr.bf16.gmra.mrb[0].mxu0 %v404
        %v602 = vpop.f32.mrb[0].mxu0
        %v603 = vadd.f32 0.0, %v602
        %v604 = vpop.f32.mrb[0].mxu0
        %v605 = vpop.f32.mrb[0].mxu0
        %v606 = vadd.f32 0.0, %v605
        %v607 = vpop.f32.mrb[0].mxu0
        %608 = vmatprep.mubr.bf16.mxu0 %v407
        %609 = vmatmul.mubr.bf16.gmra.mrb[0].mxu0 %v406
        %v610 = vpop.f32.mrb[0].mxu0
        %v611 = vadd.f32 0.0, %v610
        %v612 = vpop.f32.mrb[0].mxu0
        %v613 = vpop.f32.mrb[0].mxu0
        %v614 = vadd.f32 0.0, %v613
        %v615 = vpop.f32.mrb[0].mxu0
        %616 = vdwg.mxu0
        %v617 = vadd.f32 %v280, %v555
        %v618 = vadd.f32 %v281, %v558
        %v619 = vadd.f32 %v282, %v563
        %v620 = vadd.f32 %v283, %v566
        %v621 = vadd.f32 %v284, %v571
        %v622 = vadd.f32 %v285, %v574
        %v623 = vadd.f32 %v286, %v579
        %v624 = vadd.f32 %v287, %v582
        %v625 = vadd.f32 %v288, %v587
        %v626 = vadd.f32 %v289, %v590
        %v627 = vadd.f32 %v290, %v595
        %v628 = vadd.f32 %v291, %v598
        %v629 = vadd.f32 %v292, %v603
        %v630 = vadd.f32 %v293, %v606
        %v631 = vadd.f32 %v294, %v611
        %v632 = vadd.f32 %v295, %v614
        %633 = vst [vmem:[#allocation2] sm:$0xff] %v617
        %634 = vst [vmem:[#allocation2 + $0x8] sm:$0xff] %v618
        %635 = vst [vmem:[#allocation2 + $0x10] sm:$0xff] %v619
        %636 = vst [vmem:[#allocation2 + $0x18] sm:$0xff] %v620
        %637 = vst [vmem:[#allocation2 + $0x20] sm:$0xff] %v621
        %638 = vst [vmem:[#allocation2 + $0x28] sm:$0xff] %v622
        %639 = vst [vmem:[#allocation2 + $0x30] sm:$0xff] %v623
        %640 = vst [vmem:[#allocation2 + $0x38] sm:$0xff] %v624
        %641 = vst [vmem:[#allocation2 + $0x40] sm:$0xff] %v625
        %642 = vst [vmem:[#allocation2 + $0x48] sm:$0xff] %v626
        %643 = vst [vmem:[#allocation2 + $0x50] sm:$0xff] %v627
        %644 = vst [vmem:[#allocation2 + $0x58] sm:$0xff] %v628
        %645 = vst [vmem:[#allocation2 + $0x60] sm:$0xff] %v629
        %646 = vst [vmem:[#allocation2 + $0x68] sm:$0xff] %v630
        %647 = vst [vmem:[#allocation2 + $0x70] sm:$0xff] %v631
        %648 = vst [vmem:[#allocation2 + $0x78] sm:$0xff] %v632
        // Predicated region
        $region45: #{tpu_custom_call.1} parent=31 // pred_check
          %p649 = pneg %p260
        $region46: #{tpu_custom_call.1} parent=31 // pred_check_branch
          %651 = sbr.rel (%p649) target = $region48
        $region47: #{tpu_custom_call.1} parent=31 // pred_region
          %v652 = vld [vmem:[#allocation2] sm:$0xff]
          %v653 = vld [vmem:[#allocation2 + $0x8] sm:$0xff]
          %v654 = vld [vmem:[#allocation2 + $0x10] sm:$0xff]
          %v655 = vld [vmem:[#allocation2 + $0x18] sm:$0xff]
          %v656 = vld [vmem:[#allocation2 + $0x20] sm:$0xff]
          %v657 = vld [vmem:[#allocation2 + $0x28] sm:$0xff]
          %v658 = vld [vmem:[#allocation2 + $0x30] sm:$0xff]
          %v659 = vld [vmem:[#allocation2 + $0x38] sm:$0xff]
          %v660 = vld [vmem:[#allocation2 + $0x40] sm:$0xff]
          %v661 = vld [vmem:[#allocation2 + $0x48] sm:$0xff]
          %v662 = vld [vmem:[#allocation2 + $0x50] sm:$0xff]
          %v663 = vld [vmem:[#allocation2 + $0x58] sm:$0xff]
          %v664 = vld [vmem:[#allocation2 + $0x60] sm:$0xff]
          %v665 = vld [vmem:[#allocation2 + $0x68] sm:$0xff]
          %v666 = vld [vmem:[#allocation2 + $0x70] sm:$0xff]
          %v667 = vld [vmem:[#allocation2 + $0x78] sm:$0xff]
          %v668 = vld [vmem:[%s257] sm:$0x1]
          %v670 = vlaneseq
          %v671 = vshrl.u32 %v670, 7
          %v672 = vsub.s32 0, %v671
          %v673 = vrot.slane %v668, %v672
          %v675 = vadd.f32 %v652, %v673
          %v676 = vadd.f32 %v653, %v673
          %v677 = vadd.f32 %v654, %v673
          %v678 = vadd.f32 %v655, %v673
          %v679 = vadd.f32 %v656, %v673
          %v680 = vadd.f32 %v657, %v673
          %v681 = vadd.f32 %v658, %v673
          %v682 = vadd.f32 %v659, %v673
          %v683 = vadd.f32 %v660, %v673
          %v684 = vadd.f32 %v661, %v673
          %v685 = vadd.f32 %v662, %v673
          %v686 = vadd.f32 %v663, %v673
          %v687 = vadd.f32 %v664, %v673
          %v688 = vadd.f32 %v665, %v673
          %v689 = vadd.f32 %v666, %v673
          %v690 = vadd.f32 %v667, %v673
          %v691 = vmax.f32 %v675, 0.0
          %v692 = vmax.f32 %v676, 0.0
          %v693 = vmax.f32 %v677, 0.0
          %v694 = vmax.f32 %v678, 0.0
          %v695 = vmax.f32 %v679, 0.0
          %v696 = vmax.f32 %v680, 0.0
          %v697 = vmax.f32 %v681, 0.0
          %v698 = vmax.f32 %v682, 0.0
          %v699 = vmax.f32 %v683, 0.0
          %v700 = vmax.f32 %v684, 0.0
          %v701 = vmax.f32 %v685, 0.0
          %v702 = vmax.f32 %v686, 0.0
          %v703 = vmax.f32 %v687, 0.0
          %v704 = vmax.f32 %v688, 0.0
          %v705 = vmax.f32 %v689, 0.0
          %v706 = vmax.f32 %v690, 0.0
          %707 = vst [vmem:[%s251] sm:$0xff] %v691
          %708 = vst [vmem:[%s251 + $0x8] sm:$0xff] %v692
          %709 = vst [vmem:[%s251 + $0x10] sm:$0xff] %v693
          %710 = vst [vmem:[%s251 + $0x18] sm:$0xff] %v694
          %711 = vst [vmem:[%s251 + $0x20] sm:$0xff] %v695
          %712 = vst [vmem:[%s251 + $0x28] sm:$0xff] %v696
          %713 = vst [vmem:[%s251 + $0x30] sm:$0xff] %v697
          %714 = vst [vmem:[%s251 + $0x38] sm:$0xff] %v698
          %715 = vst [vmem:[%s251 + $0x40] sm:$0xff] %v699
          %716 = vst [vmem:[%s251 + $0x48] sm:$0xff] %v700
          %717 = vst [vmem:[%s251 + $0x50] sm:$0xff] %v701
          %718 = vst [vmem:[%s251 + $0x58] sm:$0xff] %v702
          %719 = vst [vmem:[%s251 + $0x60] sm:$0xff] %v703
          %720 = vst [vmem:[%s251 + $0x68] sm:$0xff] %v704
          %721 = vst [vmem:[%s251 + $0x70] sm:$0xff] %v705
          %722 = vst [vmem:[%s251 + $0x78] sm:$0xff] %v706
        $region48: #{tpu_custom_call.1} parent=31 // pred_fallthru
          _
        %s723 = sand.u32 %s132, 1
        %s724 = scalar_lea.sflag [#allocation5], %s723
        %s725 = sand.u32 %s132, 1
        %s726 = smul.addr %s725, 128
        %s727 = scalar_lea.vmem [#allocation8], %s726
        // Predicated region
        $region49: #{tpu_custom_call.1} parent=31 // pred_check
          %p728 = pneg %p142
        $region50: #{tpu_custom_call.1} parent=31 // pred_check_branch
          %730 = sbr.rel (%p728) target = $region52
        $region51: #{tpu_custom_call.1} parent=31 // pred_region
          %s731 = smul.u32 16, %s26
          %s733 = ssub.s32 2048, 2048
          %734 = vsyncadd %s724, %s733
          %s735 = sadd.s32 %s27, %s731
          %s736 = smul.addr %s735, 128
          %s737 = scalar_lea.hbm %s3, %s736
          %s738 = sshll.u32 %s727, 4
          %s739 = int_to_ptr.vmem [resolvable:$true] %s738
          %744 = dma.vmem_to_hbm [thread:$0]  %s739, 2048, %s737, %s724, 128, 128, 8
        $region52: #{tpu_custom_call.1} parent=31 // pred_fallthru
          _
      $region32: #{tpu_custom_call.1} parent=5 // pred_fallthru
        _
      %p745 = scmp.le.s32.totalorder 2, %s16
      // Predicated region
      $region53: #{tpu_custom_call.1} parent=5 // pred_check
        %p746 = pneg %p745
      $region54: #{tpu_custom_call.1} parent=5 // pred_check_branch
        %748 = sbr.rel (%p746) target = $region56
      $region55: #{tpu_custom_call.1} parent=5 // pred_region
        %s749 = ssub.s32 %s16, 2
        // Predicated region
        $region57: #{tpu_custom_call.1} parent=55 // pred_check
          %p750 = pneg %p148
        $region58: #{tpu_custom_call.1} parent=55 // pred_check_branch
          %752 = sbr.rel (%p750) target = $region60
        $region59: #{tpu_custom_call.1} parent=55 // pred_region
          %s753 = sand.u32 %s133, 1
          %s754 = scalar_lea.sflag [#allocation5], %s753
          %s755 = sand.u32 %s133, 1
          %s756 = smul.addr %s755, 128
          %s757 = scalar_lea.vmem [#allocation8], %s756
          %758 = dma.done %s754, 2048
        $region60: #{tpu_custom_call.1} parent=55 // pred_fallthru
          _
      $region56: #{tpu_custom_call.1} parent=5 // pred_fallthru
        _
    $region6: #{tpu_custom_call.1} parent=1 // loop_footer
      %s20 = sadd.s32 1, %s16
    $region7: #{tpu_custom_call.1} parent=1 // loop_footer_branch
      %15 = sbr.rel target = $region3
    $region8: #{tpu_custom_call.1} parent=1 // loop_exit
      _
    %759 = vsyncpa [#allocation4], 1
    %s760 = scalar_lea.sflag [#allocation4], 1
    %761 = vsyncpa %s760, 1
    %762 = vsyncpa [#allocation7], 1
    %763 = vsyncpa [#allocation5], 1
    %s764 = scalar_lea.sflag [#allocation5], 1
    %765 = vsyncpa %s764, 1

</llo_original>
